<compile_context>
chip_gen: v7x
topology: tpu7x:2x2x1
jax: 0.10.0
libtpu: 0.0.40
codegen_flags: <defaults>
</compile_context>

<pallas_src>
import functools

import jax
import jax.numpy as jnp
from jax.experimental import pallas as pl
from jax.experimental.pallas import tpu as pltpu

H1, H2, H3 = 512, 128, 32
LANES = 128


def _round_up(x, m):
    return ((x + m - 1) // m) * m


def _softplus(y):
    # numerically stable softplus: log1p(exp(-|y|)) + max(y, 0)
    return jnp.log1p(jnp.exp(-jnp.abs(y))) + jnp.maximum(y, 0.0)


def mlp_kernel(x_ref, w1_ref, b1_ref, w2_ref, b2_ref, w3_ref, b3_ref,
               w4_ref, b4_ref, o_ref):
    # bf16 x bf16 matmuls with f32 accumulation (native MXU fast path);
    # bias adds, ReLU and softplus are done in f32 (ReLU on VPU, exp/log1p on EUP).
    x = x_ref[...].astype(jnp.bfloat16)                       # in-kernel cast (VPU)
    h = jnp.dot(x, w1_ref[...],
                preferred_element_type=jnp.float32) + b1_ref[...]
    h = jnp.maximum(h, 0.0)                                   # ReLU
    h = jnp.dot(h.astype(jnp.bfloat16), w2_ref[...],
                preferred_element_type=jnp.float32) + b2_ref[...]
    h = jnp.maximum(h, 0.0)                                   # ReLU
    # Dropout(0.5): identity in eval/inference mode.
    h = jnp.dot(h.astype(jnp.bfloat16), w3_ref[...],
                preferred_element_type=jnp.float32) + b3_ref[...]
    h = jnp.maximum(h, 0.0)                                   # ReLU
    y = jnp.dot(h.astype(jnp.bfloat16), w4_ref[...],
                preferred_element_type=jnp.float32) + b4_ref[...]
    o_ref[...] = _softplus(y)                                 # F.softplus


@functools.partial(jax.jit, static_argnames=("block_m",))
def estimate_rho_do(x, params, *, block_m=512):
    """x: (B, input_dim) f32.  params: dict of w1..w4 (in,out) f32 and b1..b4 (1,out) f32."""
    B, D = x.shape
    out_dim = params["w4"].shape[1]
    out_pad = _round_up(out_dim, LANES)          # lane-dense output slab

    # --- batch tiling: big MXU-shaped tiles, clamped for small batches ---------
    bm = max(16, min(block_m, _round_up(B, 16)))
    bm = _round_up(bm, 16)                       # bf16 sublane packing friendly
    # Keep >=2 grid steps when the batch allows (v7x: 2 TensorCores share the grid).
    if B >= 512 and pl.cdiv(B, bm) < 2:
        bm = _round_up(pl.cdiv(B, 2), 16)
    B_pad = _round_up(B, bm)
    grid = (B_pad // bm,)

    # --- operand preparation (padded ragged batch / lane-padded out dim) -------
    # x stays f32 here (pad only); the bf16 cast happens inside the kernel.
    x_p = jnp.pad(x, ((0, B_pad - B), (0, 0)))
    w1 = params["w1"].astype(jnp.bfloat16)
    w2 = params["w2"].astype(jnp.bfloat16)
    w3 = params["w3"].astype(jnp.bfloat16)
    w4 = jnp.pad(params["w4"], ((0, 0), (0, out_pad - out_dim))).astype(jnp.bfloat16)
    b1 = params["b1"].astype(jnp.float32)
    b2 = params["b2"].astype(jnp.float32)
    b3 = params["b3"].astype(jnp.float32)
    b4 = jnp.pad(params["b4"].astype(jnp.float32), ((0, 0), (0, out_pad - out_dim)))

    def row_map(i):
        return (i, 0)

    def full_map(i):
        return (0, 0)

    in_specs = [
        pl.BlockSpec((bm, D), row_map),           # x (f32), streamed per grid step
        pl.BlockSpec((D, H1), full_map),          # w1 (bf16), resident
        pl.BlockSpec((1, H1), full_map),          # b1 (f32)
        pl.BlockSpec((H1, H2), full_map),         # w2
        pl.BlockSpec((1, H2), full_map),          # b2
        pl.BlockSpec((H2, H3), full_map),         # w3
        pl.BlockSpec((1, H3), full_map),          # b3
        pl.BlockSpec((H3, out_pad), full_map),    # w4 (lane-padded)
        pl.BlockSpec((1, out_pad), full_map),     # b4 (lane-padded)
    ]
    out_specs = pl.BlockSpec((bm, out_pad), row_map)

    # --- scheduler hints --------------------------------------------------------
    weight_bytes = 2 * (D * H1 + H1 * H2 + H2 * H3 + H3 * out_pad)
    bias_bytes = 4 * (H1 + H2 + H3 + out_pad)
    flops = 2 * B_pad * (D * H1 + H1 * H2 + H2 * H3 + H3 * out_pad)
    cost = pl.CostEstimate(
        flops=flops,
        transcendentals=2 * B_pad * out_pad,      # exp + log1p per output element
        bytes_accessed=B_pad * D * 4 + B_pad * out_pad * 4 + weight_bytes + bias_bytes,
    )

    # Scoped VMEM: double-buffered x/out tiles + resident (double-buffered) weights
    # + live f32 intermediates.  Raise above default so big tiles don't trip it.
    est_vmem = (2 * bm * D * 4                     # x tile (f32), 2 buffers
                + 2 * bm * out_pad * 4             # out tile (f32), 2 buffers
                + 2 * (weight_bytes + bias_bytes)  # params, 2 buffers each
                + 4 * bm * (H1 + H2 + H3 + out_pad))
    vmem_limit = int(min(max(2 * est_vmem, 32 * 1024 * 1024), 48 * 1024 * 1024))

    out = pl.pallas_call(
        mlp_kernel,
        out_shape=jax.ShapeDtypeStruct((B_pad, out_pad), jnp.float32),
        grid=grid,
        in_specs=in_specs,
        out_specs=out_specs,
        cost_estimate=cost,
        compiler_params=pltpu.CompilerParams(
            dimension_semantics=("parallel",),
            vmem_limit_bytes=vmem_limit),
    )(x_p, w1, b1, w2, b2, w3, b3, w4, b4)

    return out[:B, :out_dim]


def init_params(key, input_dim, output_dim):
    """Deterministic synthetic init (scaled normal, ~kaiming magnitude)."""
    dims = [(input_dim, H1), (H1, H2), (H2, H3), (H3, output_dim)]
    params = {}
    keys = jax.random.split(key, 2 * len(dims))
    for i, (fin, fout) in enumerate(dims):
        kw, kb = keys[2 * i], keys[2 * i + 1]
        params[f"w{i+1}"] = (jax.random.normal(kw, (fin, fout), jnp.float32)
                             / jnp.sqrt(jnp.float32(fin)))
        params[f"b{i+1}"] = 0.01 * jax.random.normal(kb, (1, fout), jnp.float32)
    return params


def reference_f32(x, params):
    h = jnp.maximum(x @ params["w1"] + params["b1"], 0.0)
    h = jnp.maximum(h @ params["w2"] + params["b2"], 0.0)
    h = jnp.maximum(h @ params["w3"] + params["b3"], 0.0)
    y = h @ params["w4"] + params["b4"]
    return jax.nn.softplus(y)


def reference_bf16(x, params):
    """Plain-JAX reference with the same bf16-inputs / f32-accumulation recipe."""
    bf = jnp.bfloat16
    h = jnp.maximum(jnp.dot(x.astype(bf), params["w1"].astype(bf),
                            preferred_element_type=jnp.float32) + params["b1"], 0.0)
    h = jnp.maximum(jnp.dot(h.astype(bf), params["w2"].astype(bf),
                            preferred_element_type=jnp.float32) + params["b2"], 0.0)
    h = jnp.maximum(jnp.dot(h.astype(bf), params["w3"].astype(bf),
                            preferred_element_type=jnp.float32) + params["b3"], 0.0)
    y = jnp.dot(h.astype(bf), params["w4"].astype(bf),
                preferred_element_type=jnp.float32) + params["b4"]
    return jax.nn.softplus(y)


if __name__ == "__main__":
    key = jax.random.PRNGKey(0)
    k_x, k_p, k_x2 = jax.random.split(key, 3)

    # Small shapes consistent with the module: batch=8, input_dim=32, output_dim=4.
    B, input_dim, output_dim = 8, 32, 4
    x = jax.random.normal(k_x, (B, input_dim), jnp.float32)
    params = init_params(k_p, input_dim, output_dim)

    out = jax.block_until_ready(estimate_rho_do(x, params))
    assert out.shape == (B, output_dim)
    assert jnp.allclose(out, reference_bf16(x, params), atol=2e-3, rtol=2e-3), \
        "mismatch vs bf16-consistent reference"
    assert jnp.allclose(out, reference_f32(x, params), atol=5e-2, rtol=5e-2), \
        "mismatch vs f32 reference"

    # Ragged batch + multi-step grid path (exercises padding / parallel grid).
    B2 = 300
    x2 = jax.random.normal(k_x2, (B2, input_dim), jnp.float32)
    out2 = jax.block_until_ready(estimate_rho_do(x2, params, block_m=128))
    assert out2.shape == (B2, output_dim)
    assert jnp.allclose(out2, reference_bf16(x2, params), atol=2e-3, rtol=2e-3), \
        "ragged-batch mismatch vs bf16-consistent reference"

    print("KERNEL_OK")
</pallas_src>

<mosaic_0001>
module attributes {stable_mosaic.version = 11 : i64} {
  func.func @mlp_kernel(%arg0: i32, %arg1: memref<16x32xf32, #tpu.memory_space<vmem>>, %arg2: memref<32x512xbf16, #tpu.memory_space<vmem>>, %arg3: memref<1x512xf32, #tpu.memory_space<vmem>>, %arg4: memref<512x128xbf16, #tpu.memory_space<vmem>>, %arg5: memref<1x128xf32, #tpu.memory_space<vmem>>, %arg6: memref<128x32xbf16, #tpu.memory_space<vmem>>, %arg7: memref<1x32xf32, #tpu.memory_space<vmem>>, %arg8: memref<32x128xbf16, #tpu.memory_space<vmem>>, %arg9: memref<1x128xf32, #tpu.memory_space<vmem>>, %arg10: memref<16x128xf32, #tpu.memory_space<vmem>>) attributes {dimension_semantics = [#tpu.dimension_semantics<parallel>], iteration_bounds = array<i64: 1>, scalar_prefetch = 0 : i64, scratch_operands = 0 : i64, tpu.core_type = #tpu.core_type<tc>, window_params = [{transform_indices = @transform_0, window_bounds = array<i64: 16, 32>}, {pipeline_mode = #tpu.pipeline_mode<synchronous>, transform_indices = @transform_1, window_bounds = array<i64: 32, 512>}, {pipeline_mode = #tpu.pipeline_mode<synchronous>, transform_indices = @transform_2, window_bounds = array<i64: 1, 512>}, {pipeline_mode = #tpu.pipeline_mode<synchronous>, transform_indices = @transform_3, window_bounds = array<i64: 512, 128>}, {pipeline_mode = #tpu.pipeline_mode<synchronous>, transform_indices = @transform_4, window_bounds = array<i64: 1, 128>}, {pipeline_mode = #tpu.pipeline_mode<synchronous>, transform_indices = @transform_5, window_bounds = array<i64: 128, 32>}, {pipeline_mode = #tpu.pipeline_mode<synchronous>, transform_indices = @transform_6, window_bounds = array<i64: 1, 32>}, {pipeline_mode = #tpu.pipeline_mode<synchronous>, transform_indices = @transform_7, window_bounds = array<i64: 32, 128>}, {pipeline_mode = #tpu.pipeline_mode<synchronous>, transform_indices = @transform_8, window_bounds = array<i64: 1, 128>}, {transform_indices = @transform_9, window_bounds = array<i64: 16, 128>}]} {
    %c0 = arith.constant 0 : index
    %c0_0 = arith.constant 0 : index
    %0 = vector.load %arg1[%c0, %c0_0] : memref<16x32xf32, #tpu.memory_space<vmem>>, vector<16x32xf32>
    %1 = arith.truncf %0 : vector<16x32xf32> to vector<16x32xbf16>
    %c0_1 = arith.constant 0 : index
    %c0_2 = arith.constant 0 : index
    %2 = vector.load %arg2[%c0_1, %c0_2] : memref<32x512xbf16, #tpu.memory_space<vmem>>, vector<32x512xbf16>
    %cst = arith.constant dense<0.000000e+00> : vector<16x512xf32>
    %3 = tpu.matmul %1, %2, %cst {dimension_numbers = #tpu.dot_dimension_numbers<[1], [0], [0], [1], [0, 0, 1, 1], [], []>} : vector<16x32xbf16>, vector<32x512xbf16>, vector<16x512xf32> -> vector<16x512xf32>
    %c0_3 = arith.constant 0 : index
    %c0_4 = arith.constant 0 : index
    %4 = vector.load %arg3[%c0_3, %c0_4] : memref<1x512xf32, #tpu.memory_space<vmem>>, vector<1x512xf32>
    %5 = vector.broadcast %4 : vector<1x512xf32> to vector<16x512xf32>
    %6 = arith.addf %3, %5 : vector<16x512xf32>
    %cst_5 = arith.constant 0.000000e+00 : f32
    %7 = vector.broadcast %cst_5 : f32 to vector<16x512xf32>
    %8 = arith.maximumf %6, %7 : vector<16x512xf32>
    %9 = arith.truncf %8 : vector<16x512xf32> to vector<16x512xbf16>
    %c0_6 = arith.constant 0 : index
    %c0_7 = arith.constant 0 : index
    %10 = vector.load %arg4[%c0_6, %c0_7] : memref<512x128xbf16, #tpu.memory_space<vmem>>, vector<512x128xbf16>
    %cst_8 = arith.constant dense<0.000000e+00> : vector<16x128xf32>
    %11 = tpu.matmul %9, %10, %cst_8 {dimension_numbers = #tpu.dot_dimension_numbers<[1], [0], [0], [1], [0, 0, 1, 1], [], []>} : vector<16x512xbf16>, vector<512x128xbf16>, vector<16x128xf32> -> vector<16x128xf32>
    %c0_9 = arith.constant 0 : index
    %c0_10 = arith.constant 0 : index
    %12 = vector.load %arg5[%c0_9, %c0_10] : memref<1x128xf32, #tpu.memory_space<vmem>>, vector<1x128xf32>
    %13 = vector.broadcast %12 : vector<1x128xf32> to vector<16x128xf32>
    %14 = arith.addf %11, %13 : vector<16x128xf32>
    %cst_11 = arith.constant 0.000000e+00 : f32
    %15 = vector.broadcast %cst_11 : f32 to vector<16x128xf32>
    %16 = arith.maximumf %14, %15 : vector<16x128xf32>
    %17 = arith.truncf %16 : vector<16x128xf32> to vector<16x128xbf16>
    %c0_12 = arith.constant 0 : index
    %c0_13 = arith.constant 0 : index
    %18 = vector.load %arg6[%c0_12, %c0_13] : memref<128x32xbf16, #tpu.memory_space<vmem>>, vector<128x32xbf16>
    %cst_14 = arith.constant dense<0.000000e+00> : vector<16x32xf32>
    %19 = tpu.matmul %17, %18, %cst_14 {dimension_numbers = #tpu.dot_dimension_numbers<[1], [0], [0], [1], [0, 0, 1, 1], [], []>} : vector<16x128xbf16>, vector<128x32xbf16>, vector<16x32xf32> -> vector<16x32xf32>
    %c0_15 = arith.constant 0 : index
    %c0_16 = arith.constant 0 : index
    %20 = vector.load %arg7[%c0_15, %c0_16] : memref<1x32xf32, #tpu.memory_space<vmem>>, vector<1x32xf32>
    %21 = vector.broadcast %20 : vector<1x32xf32> to vector<16x32xf32>
    %22 = arith.addf %19, %21 : vector<16x32xf32>
    %cst_17 = arith.constant 0.000000e+00 : f32
    %23 = vector.broadcast %cst_17 : f32 to vector<16x32xf32>
    %24 = arith.maximumf %22, %23 : vector<16x32xf32>
    %25 = arith.truncf %24 : vector<16x32xf32> to vector<16x32xbf16>
    %c0_18 = arith.constant 0 : index
    %c0_19 = arith.constant 0 : index
    %26 = vector.load %arg8[%c0_18, %c0_19] : memref<32x128xbf16, #tpu.memory_space<vmem>>, vector<32x128xbf16>
    %cst_20 = arith.constant dense<0.000000e+00> : vector<16x128xf32>
    %27 = tpu.matmul %25, %26, %cst_20 {dimension_numbers = #tpu.dot_dimension_numbers<[1], [0], [0], [1], [0, 0, 1, 1], [], []>} : vector<16x32xbf16>, vector<32x128xbf16>, vector<16x128xf32> -> vector<16x128xf32>
    %c0_21 = arith.constant 0 : index
    %c0_22 = arith.constant 0 : index
    %28 = vector.load %arg9[%c0_21, %c0_22] : memref<1x128xf32, #tpu.memory_space<vmem>>, vector<1x128xf32>
    %29 = vector.broadcast %28 : vector<1x128xf32> to vector<16x128xf32>
    %30 = arith.addf %27, %29 : vector<16x128xf32>
    %31 = math.absf %30 : vector<16x128xf32>
    %cst_23 = arith.constant 0.000000e+00 : f32
    %32 = vector.broadcast %cst_23 : f32 to vector<16x128xf32>
    %33 = arith.subf %32, %31 : vector<16x128xf32>
    %34 = math.exp %33 : vector<16x128xf32>
    %35 = math.log1p %34 : vector<16x128xf32>
    %cst_24 = arith.constant 0.000000e+00 : f32
    %36 = vector.broadcast %cst_24 : f32 to vector<16x128xf32>
    %37 = arith.maximumf %30, %36 : vector<16x128xf32>
    %38 = arith.addf %35, %37 : vector<16x128xf32>
    %c0_25 = arith.constant 0 : index
    %c0_26 = arith.constant 0 : index
    %39 = vector.load %arg10[%c0_25, %c0_26] : memref<16x128xf32, #tpu.memory_space<vmem>>, vector<16x128xf32>
    tpu.vector_store %arg10[%c0_25, %c0_26], %38 {strides = array<i32>} : memref<16x128xf32, #tpu.memory_space<vmem>>, vector<16x128xf32>,
    return
  }
  func.func @transform_0(%arg0: i32) -> (i32, i32) {
    %c0_i32 = arith.constant 0 : i32
    %c0_i32_0 = arith.constant 0 : i32
    return %arg0, %c0_i32 : i32, i32
  }
  func.func @transform_1(%arg0: i32) -> (i32, i32) {
    %c0_i32 = arith.constant 0 : i32
    %c0_i32_0 = arith.constant 0 : i32
    %c0_i32_1 = arith.constant 0 : i32
    return %c0_i32, %c0_i32_0 : i32, i32
  }
  func.func @transform_2(%arg0: i32) -> (i32, i32) {
    %c0_i32 = arith.constant 0 : i32
    %c0_i32_0 = arith.constant 0 : i32
    %c0_i32_1 = arith.constant 0 : i32
    return %c0_i32, %c0_i32_0 : i32, i32
  }
  func.func @transform_3(%arg0: i32) -> (i32, i32) {
    %c0_i32 = arith.constant 0 : i32
    %c0_i32_0 = arith.constant 0 : i32
    %c0_i32_1 = arith.constant 0 : i32
    return %c0_i32, %c0_i32_0 : i32, i32
  }
  func.func @transform_4(%arg0: i32) -> (i32, i32) {
    %c0_i32 = arith.constant 0 : i32
    %c0_i32_0 = arith.constant 0 : i32
    %c0_i32_1 = arith.constant 0 : i32
    return %c0_i32, %c0_i32_0 : i32, i32
  }
  func.func @transform_5(%arg0: i32) -> (i32, i32) {
    %c0_i32 = arith.constant 0 : i32
    %c0_i32_0 = arith.constant 0 : i32
    %c0_i32_1 = arith.constant 0 : i32
    return %c0_i32, %c0_i32_0 : i32, i32
  }
  func.func @transform_6(%arg0: i32) -> (i32, i32) {
    %c0_i32 = arith.constant 0 : i32
    %c0_i32_0 = arith.constant 0 : i32
    %c0_i32_1 = arith.constant 0 : i32
    return %c0_i32, %c0_i32_0 : i32, i32
  }
  func.func @transform_7(%arg0: i32) -> (i32, i32) {
    %c0_i32 = arith.constant 0 : i32
    %c0_i32_0 = arith.constant 0 : i32
    %c0_i32_1 = arith.constant 0 : i32
    return %c0_i32, %c0_i32_0 : i32, i32
  }
  func.func @transform_8(%arg0: i32) -> (i32, i32) {
    %c0_i32 = arith.constant 0 : i32
    %c0_i32_0 = arith.constant 0 : i32
    %c0_i32_1 = arith.constant 0 : i32
    return %c0_i32, %c0_i32_0 : i32, i32
  }
  func.func @transform_9(%arg0: i32) -> (i32, i32) {
    %c0_i32 = arith.constant 0 : i32
    %c0_i32_0 = arith.constant 0 : i32
    return %arg0, %c0_i32 : i32, i32
  }
}

</mosaic_0001>

<llo_original>
// kernel: estimate_rho_do.1
$region0: #{estimate_rho_do.1}
  #allocation0 [shape = 'u32[]', space=smem, size = 0x4, offset = 0x4, fixed_abs, tag = 'smem constant byte address 0x4 - core index']
  #allocation1 [shape = 'u32[144,128]{1,0:T(1,128)}', space=vmem, size = 0x12000, scoped, tag = 'internal scratch']
  %s0 = inlined_call_operand.vmem [shape: f32[16,32], index: 0, kind: input, shape index: {}]
  %s1 = inlined_call_operand.vmem [shape: bf16[32,512], index: 1, kind: input, shape index: {}]
  %s2 = inlined_call_operand.vmem [shape: f32[1,512], index: 2, kind: input, shape index: {}]
  %s3 = inlined_call_operand.vmem [shape: bf16[512,128], index: 3, kind: input, shape index: {}]
  %s4 = inlined_call_operand.vmem [shape: f32[1,128], index: 4, kind: input, shape index: {}]
  %s5 = inlined_call_operand.vmem [shape: bf16[128,32], index: 5, kind: input, shape index: {}]
  %s6 = inlined_call_operand.vmem [shape: f32[1,32], index: 6, kind: input, shape index: {}]
  %s7 = inlined_call_operand.vmem [shape: bf16[32,128], index: 7, kind: input, shape index: {}]
  %s8 = inlined_call_operand.vmem [shape: f32[1,128], index: 8, kind: input, shape index: {}]
  %s9 = inlined_call_operand.vmem [shape: f32[16,128], index: 9, kind: output, shape index: {}]
  %s10 = sld [smem:[#allocation0]]
  $region46: #{estimate_rho_do.1} parent=0
    _
  %s12 = ssub.s32 1, %s10
  %s13 = scalar_select 0, %s12, %s10
  // Predicated region
  $region2: #{estimate_rho_do.1} parent=0 // pred_check
    _
  $region3: #{estimate_rho_do.1} parent=0 // pred_check_branch
    %15 = sbr.rel (0) target = $region5
  $region4: #{estimate_rho_do.1} parent=0 // pred_region
    _
  $region5: #{estimate_rho_do.1} parent=0 // pred_fallthru
    _
  // Predicated region
  $region6: #{estimate_rho_do.1} parent=0 // pred_check
    _
  $region7: #{estimate_rho_do.1} parent=0 // pred_check_branch
    %17 = sbr.rel (0) target = $region9
  $region8: #{estimate_rho_do.1} parent=0 // pred_region
    _
  $region9: #{estimate_rho_do.1} parent=0 // pred_fallthru
    _
  // Predicated region
  $region10: #{estimate_rho_do.1} parent=0 // pred_check
    _
  $region11: #{estimate_rho_do.1} parent=0 // pred_check_branch
    %19 = sbr.rel (0) target = $region13
  $region12: #{estimate_rho_do.1} parent=0 // pred_region
    _
  $region13: #{estimate_rho_do.1} parent=0 // pred_fallthru
    _
  // Predicated region
  $region14: #{estimate_rho_do.1} parent=0 // pred_check
    _
  $region15: #{estimate_rho_do.1} parent=0 // pred_check_branch
    %21 = sbr.rel (0) target = $region17
  $region16: #{estimate_rho_do.1} parent=0 // pred_region
    _
  $region17: #{estimate_rho_do.1} parent=0 // pred_fallthru
    _
  // Predicated region
  $region18: #{estimate_rho_do.1} parent=0 // pred_check
    _
  $region19: #{estimate_rho_do.1} parent=0 // pred_check_branch
    %23 = sbr.rel (0) target = $region21
  $region20: #{estimate_rho_do.1} parent=0 // pred_region
    _
  $region21: #{estimate_rho_do.1} parent=0 // pred_fallthru
    _
  // Predicated region
  $region22: #{estimate_rho_do.1} parent=0 // pred_check
    _
  $region23: #{estimate_rho_do.1} parent=0 // pred_check_branch
    %25 = sbr.rel (0) target = $region25
  $region24: #{estimate_rho_do.1} parent=0 // pred_region
    _
  $region25: #{estimate_rho_do.1} parent=0 // pred_fallthru
    _
  // Predicated region
  $region26: #{estimate_rho_do.1} parent=0 // pred_check
    _
  $region27: #{estimate_rho_do.1} parent=0 // pred_check_branch
    %27 = sbr.rel (0) target = $region29
  $region28: #{estimate_rho_do.1} parent=0 // pred_region
    _
  $region29: #{estimate_rho_do.1} parent=0 // pred_fallthru
    _
  // Predicated region
  $region30: #{estimate_rho_do.1} parent=0 // pred_check
    _
  $region31: #{estimate_rho_do.1} parent=0 // pred_check_branch
    %29 = sbr.rel (0) target = $region33
  $region32: #{estimate_rho_do.1} parent=0 // pred_region
    _
  $region33: #{estimate_rho_do.1} parent=0 // pred_fallthru
    _
  // Predicated region
  $region34: #{estimate_rho_do.1} parent=0 // pred_check
    _
  $region35: #{estimate_rho_do.1} parent=0 // pred_check_branch
    %31 = sbr.rel (0) target = $region37
  $region36: #{estimate_rho_do.1} parent=0 // pred_region
    _
  $region37: #{estimate_rho_do.1} parent=0 // pred_fallthru
    _
  %v33 = vld [vmem:[%s0] sm:$0xff]
  %v34 = vld [vmem:[%s0 + $0x8] sm:$0xff]
  %v35 = vpack.c.bf16 %v34, %v33
  %v36 = vld [vmem:[%s1] sm:$0xff]
  %v37 = vld [vmem:[%s1 + $0x8] sm:$0xff]
  %v38 = vld [vmem:[%s1 + $0x10] sm:$0xff]
  %v39 = vld [vmem:[%s1 + $0x18] sm:$0xff]
  %v40 = vld [vmem:[%s1 + $0x20] sm:$0xff]
  %v41 = vld [vmem:[%s1 + $0x28] sm:$0xff]
  %v42 = vld [vmem:[%s1 + $0x30] sm:$0xff]
  %v43 = vld [vmem:[%s1 + $0x38] sm:$0xff]
  %v44 = vld [vmem:[%s2] sm:$0xf]
  %v46 = vlaneseq
  %v47 = vshrl.u32 %v46, 7
  %v48 = vsub.s32 0, %v47
  %v49 = vrot.slane %v44, %v48
  %v50 = vlaneseq
  %v51 = vshrl.u32 %v50, 7
  %v52 = vsub.s32 1, %v51
  %v53 = vrot.slane %v44, %v52
  %v54 = vlaneseq
  %v55 = vshrl.u32 %v54, 7
  %v56 = vsub.s32 2, %v55
  %v57 = vrot.slane %v44, %v56
  %v58 = vlaneseq
  %v59 = vshrl.u32 %v58, 7
  %v60 = vsub.s32 3, %v59
  %v61 = vrot.slane %v44, %v60
  %v74 = vunpack.c.l.b16 %v36
  %v75 = vunpack.c.h.b16 %v36
  %v76 = vunpack.c.l.b16 %v37
  %v77 = vunpack.c.h.b16 %v37
  %v78 = vunpack.c.l.b16 %v38
  %v79 = vunpack.c.h.b16 %v38
  %v80 = vunpack.c.l.b16 %v39
  %v81 = vunpack.c.h.b16 %v39
  %v82 = vunpack.c.l.b16 %v40
  %v83 = vunpack.c.h.b16 %v40
  %v84 = vunpack.c.l.b16 %v41
  %v85 = vunpack.c.h.b16 %v41
  %v86 = vunpack.c.l.b16 %v42
  %v87 = vunpack.c.h.b16 %v42
  %v88 = vunpack.c.l.b16 %v43
  %v89 = vunpack.c.h.b16 %v43
  %v90 = vpack.c.b16 %v78, %v74
  %v91 = vpack.c.b16 %v79, %v75
  %v92 = vpack.c.b16 %v80, %v76
  %v93 = vpack.c.b16 %v81, %v77
  %v94 = vpack.c.b16 %v86, %v82
  %v95 = vpack.c.b16 %v87, %v83
  %v96 = vpack.c.b16 %v88, %v84
  %v97 = vpack.c.b16 %v89, %v85
  %vm106 = vcmask 261120
  %v108 = vsel %vm106, %v35, 0
  %110 = vmatprep.subr.bf16.mxu0 %v91
  %111 = vmatpush1.bf16.msra.mxu0 %v90
  %112 = vmatprep.subr.bf16.mxu0 %v95
  %113 = vmatpush1.bf16.msra.mxu0 %v94
  %114 = vmatprep.subr.bf16.mxu0 0
  %115 = vmatpush1.bf16.msra.mxu0 0
  %116 = vmatprep.subr.bf16.mxu0 0
  %117 = vmatpush1.bf16.msra.mxu0 0
  %118 = vmatprep.subr.bf16.mxu0 0
  %119 = vmatpush1.bf16.msra.mxu0 0
  %120 = vmatprep.subr.bf16.mxu0 0
  %121 = vmatpush1.bf16.msra.mxu0 0
  %122 = vmatprep.subr.bf16.mxu0 0
  %123 = vmatpush1.bf16.msra.mxu0 0
  %124 = vmatprep.subr.bf16.mxu0 0
  %125 = vmatpush1.bf16.msra.mxu0 0
  %126 = vmatprep.subr.bf16.mxu0 0
  %127 = vmatpush1.bf16.msra.mxu0 0
  %128 = vmatprep.subr.bf16.mxu0 0
  %129 = vmatpush1.bf16.msra.mxu0 0
  %130 = vmatprep.subr.bf16.mxu0 0
  %131 = vmatpush1.bf16.msra.mxu0 0
  %132 = vmatprep.subr.bf16.mxu0 0
  %133 = vmatpush1.bf16.msra.mxu0 0
  %134 = vmatprep.subr.bf16.mxu0 0
  %135 = vmatpush1.bf16.msra.mxu0 0
  %136 = vmatprep.subr.bf16.mxu0 0
  %137 = vmatpush1.bf16.msra.mxu0 0
  %138 = vmatprep.subr.bf16.mxu0 0
  %139 = vmatpush1.bf16.msra.mxu0 0
  %140 = vmatprep.subr.bf16.mxu0 0
  %141 = vmatpush1.bf16.msra.mxu0 0
  %142 = vmatprep.mubr.bf16.mxu0 0
  %143 = vmatmul.mubr.bf16.gmra.mrb[0].mxu0 %v108
  %v144 = vpop.f32.mrb[0].mxu0
  %v145 = vadd.f32 %v49, %v144
  %v146 = vpop.f32.mrb[0].mxu0
  %v147 = vadd.f32 %v53, %v146
  %v148 = vpop.f32.mrb[0].mxu0
  %v149 = vadd.f32 %v49, %v148
  %v150 = vpop.f32.mrb[0].mxu0
  %v151 = vadd.f32 %v53, %v150
  %152 = vdwg.mxu0
  %153 = vmatprep.subr.bf16.mxu0 %v93
  %154 = vmatpush1.bf16.msra.mxu0 %v92
  %155 = vmatprep.subr.bf16.mxu0 %v97
  %156 = vmatpush1.bf16.msra.mxu0 %v96
  %157 = vmatprep.subr.bf16.mxu0 0
  %158 = vmatpush1.bf16.msra.mxu0 0
  %159 = vmatprep.subr.bf16.mxu0 0
  %160 = vmatpush1.bf16.msra.mxu0 0
  %161 = vmatprep.subr.bf16.mxu0 0
  %162 = vmatpush1.bf16.msra.mxu0 0
  %163 = vmatprep.subr.bf16.mxu0 0
  %164 = vmatpush1.bf16.msra.mxu0 0
  %165 = vmatprep.subr.bf16.mxu0 0
  %166 = vmatpush1.bf16.msra.mxu0 0
  %167 = vmatprep.subr.bf16.mxu0 0
  %168 = vmatpush1.bf16.msra.mxu0 0
  %169 = vmatprep.subr.bf16.mxu0 0
  %170 = vmatpush1.bf16.msra.mxu0 0
  %171 = vmatprep.subr.bf16.mxu0 0
  %172 = vmatpush1.bf16.msra.mxu0 0
  %173 = vmatprep.subr.bf16.mxu0 0
  %174 = vmatpush1.bf16.msra.mxu0 0
  %175 = vmatprep.subr.bf16.mxu0 0
  %176 = vmatpush1.bf16.msra.mxu0 0
  %177 = vmatprep.subr.bf16.mxu0 0
  %178 = vmatpush1.bf16.msra.mxu0 0
  %179 = vmatprep.subr.bf16.mxu0 0
  %180 = vmatpush1.bf16.msra.mxu0 0
  %181 = vmatprep.subr.bf16.mxu0 0
  %182 = vmatpush1.bf16.msra.mxu0 0
  %183 = vmatprep.subr.bf16.mxu0 0
  %184 = vmatpush1.bf16.msra.mxu0 0
  %185 = vmatprep.mubr.bf16.mxu0 0
  %186 = vmatmul.mubr.bf16.gmra.mrb[0].mxu0 %v108
  %v187 = vpop.f32.mrb[0].mxu0
  %v188 = vadd.f32 %v57, %v187
  %v189 = vpop.f32.mrb[0].mxu0
  %v190 = vadd.f32 %v61, %v189
  %v191 = vpop.f32.mrb[0].mxu0
  %v192 = vadd.f32 %v57, %v191
  %v193 = vpop.f32.mrb[0].mxu0
  %v194 = vadd.f32 %v61, %v193
  %195 = vdwg.mxu0
  %v196 = vmax.f32 %v145, 0.0
  %v197 = vmax.f32 %v147, 0.0
  %v198 = vmax.f32 %v188, 0.0
  %v199 = vmax.f32 %v190, 0.0
  %v200 = vmax.f32 %v149, 0.0
  %v201 = vmax.f32 %v151, 0.0
  %v202 = vmax.f32 %v192, 0.0
  %v203 = vmax.f32 %v194, 0.0
  %v204 = vpack.c.bf16 %v200, %v196
  %v205 = vpack.c.bf16 %v201, %v197
  %v206 = vpack.c.bf16 %v202, %v198
  %v207 = vpack.c.bf16 %v203, %v199
  %v208 = vld [vmem:[%s3] sm:$0xf]
  %v209 = vld [vmem:[%s3 + $0x4] sm:$0xf]
  %v210 = vld [vmem:[%s3 + $0x8] sm:$0xf]
  %v211 = vld [vmem:[%s3 + $0xc] sm:$0xf]
  %v212 = vld [vmem:[%s3 + $0x10] sm:$0xf]
  %v213 = vld [vmem:[%s3 + $0x14] sm:$0xf]
  %v214 = vld [vmem:[%s3 + $0x18] sm:$0xf]
  %v215 = vld [vmem:[%s3 + $0x1c] sm:$0xf]
  %v216 = vld [vmem:[%s3 + $0x20] sm:$0xf]
  %v217 = vld [vmem:[%s3 + $0x24] sm:$0xf]
  %v218 = vld [vmem:[%s3 + $0x28] sm:$0xf]
  %v219 = vld [vmem:[%s3 + $0x2c] sm:$0xf]
  %v220 = vld [vmem:[%s3 + $0x30] sm:$0xf]
  %v221 = vld [vmem:[%s3 + $0x34] sm:$0xf]
  %v222 = vld [vmem:[%s3 + $0x38] sm:$0xf]
  %v223 = vld [vmem:[%s3 + $0x3c] sm:$0xf]
  %v224 = vld [vmem:[%s3 + $0x40] sm:$0xf]
  %v225 = vld [vmem:[%s3 + $0x44] sm:$0xf]
  %v226 = vld [vmem:[%s3 + $0x48] sm:$0xf]
  %v227 = vld [vmem:[%s3 + $0x4c] sm:$0xf]
  %v228 = vld [vmem:[%s3 + $0x50] sm:$0xf]
  %v229 = vld [vmem:[%s3 + $0x54] sm:$0xf]
  %v230 = vld [vmem:[%s3 + $0x58] sm:$0xf]
  %v231 = vld [vmem:[%s3 + $0x5c] sm:$0xf]
  %v232 = vld [vmem:[%s3 + $0x60] sm:$0xf]
  %v233 = vld [vmem:[%s3 + $0x64] sm:$0xf]
  %v234 = vld [vmem:[%s3 + $0x68] sm:$0xf]
  %v235 = vld [vmem:[%s3 + $0x6c] sm:$0xf]
  %v236 = vld [vmem:[%s3 + $0x70] sm:$0xf]
  %v237 = vld [vmem:[%s3 + $0x74] sm:$0xf]
  %v238 = vld [vmem:[%s3 + $0x78] sm:$0xf]
  %v239 = vld [vmem:[%s3 + $0x7c] sm:$0xf]
  %v240 = vld [vmem:[%s3 + $0x80] sm:$0xf]
  %v241 = vld [vmem:[%s3 + $0x84] sm:$0xf]
  %v242 = vld [vmem:[%s3 + $0x88] sm:$0xf]
  %v243 = vld [vmem:[%s3 + $0x8c] sm:$0xf]
  %v244 = vld [vmem:[%s3 + $0x90] sm:$0xf]
  %v245 = vld [vmem:[%s3 + $0x94] sm:$0xf]
  %v246 = vld [vmem:[%s3 + $0x98] sm:$0xf]
  %v247 = vld [vmem:[%s3 + $0x9c] sm:$0xf]
  %v248 = vld [vmem:[%s3 + $0xa0] sm:$0xf]
  %v249 = vld [vmem:[%s3 + $0xa4] sm:$0xf]
  %v250 = vld [vmem:[%s3 + $0xa8] sm:$0xf]
  %v251 = vld [vmem:[%s3 + $0xac] sm:$0xf]
  %v252 = vld [vmem:[%s3 + $0xb0] sm:$0xf]
  %v253 = vld [vmem:[%s3 + $0xb4] sm:$0xf]
  %v254 = vld [vmem:[%s3 + $0xb8] sm:$0xf]
  %v255 = vld [vmem:[%s3 + $0xbc] sm:$0xf]
  %v256 = vld [vmem:[%s3 + $0xc0] sm:$0xf]
  %v257 = vld [vmem:[%s3 + $0xc4] sm:$0xf]
  %v258 = vld [vmem:[%s3 + $0xc8] sm:$0xf]
  %v259 = vld [vmem:[%s3 + $0xcc] sm:$0xf]
  %v260 = vld [vmem:[%s3 + $0xd0] sm:$0xf]
  %v261 = vld [vmem:[%s3 + $0xd4] sm:$0xf]
  %v262 = vld [vmem:[%s3 + $0xd8] sm:$0xf]
  %v263 = vld [vmem:[%s3 + $0xdc] sm:$0xf]
  %v264 = vld [vmem:[%s3 + $0xe0] sm:$0xf]
  %v265 = vld [vmem:[%s3 + $0xe4] sm:$0xf]
  %v266 = vld [vmem:[%s3 + $0xe8] sm:$0xf]
  %v267 = vld [vmem:[%s3 + $0xec] sm:$0xf]
  %v268 = vld [vmem:[%s3 + $0xf0] sm:$0xf]
  %v269 = vld [vmem:[%s3 + $0xf4] sm:$0xf]
  %v270 = vld [vmem:[%s3 + $0xf8] sm:$0xf]
  %v271 = vld [vmem:[%s3 + $0xfc] sm:$0xf]
  %v272 = vld [vmem:[%s4] sm:$0x1]
  %v274 = vlaneseq
  %v275 = vshrl.u32 %v274, 7
  %v276 = vsub.s32 0, %v275
  %v277 = vrot.slane %v272, %v276
  %v343 = vunpack.c.l.b16 %v208
  %v344 = vunpack.c.l.b16 %v209
  %v345 = vunpack.c.l.b16 %v210
  %v346 = vunpack.c.l.b16 %v211
  %v347 = vunpack.c.l.b16 %v212
  %v348 = vunpack.c.l.b16 %v213
  %v349 = vunpack.c.l.b16 %v214
  %v350 = vunpack.c.l.b16 %v215
  %v351 = vunpack.c.l.b16 %v216
  %v352 = vunpack.c.l.b16 %v217
  %v353 = vunpack.c.l.b16 %v218
  %v354 = vunpack.c.l.b16 %v219
  %v355 = vunpack.c.l.b16 %v220
  %v356 = vunpack.c.l.b16 %v221
  %v357 = vunpack.c.l.b16 %v222
  %v358 = vunpack.c.l.b16 %v223
  %v359 = vunpack.c.l.b16 %v224
  %v360 = vunpack.c.l.b16 %v225
  %v361 = vunpack.c.l.b16 %v226
  %v362 = vunpack.c.l.b16 %v227
  %v363 = vunpack.c.l.b16 %v228
  %v364 = vunpack.c.l.b16 %v229
  %v365 = vunpack.c.l.b16 %v230
  %v366 = vunpack.c.l.b16 %v231
  %v367 = vunpack.c.l.b16 %v232
  %v368 = vunpack.c.l.b16 %v233
  %v369 = vunpack.c.l.b16 %v234
  %v370 = vunpack.c.l.b16 %v235
  %v371 = vunpack.c.l.b16 %v236
  %v372 = vunpack.c.l.b16 %v237
  %v373 = vunpack.c.l.b16 %v238
  %v374 = vunpack.c.l.b16 %v239
  %v375 = vunpack.c.l.b16 %v240
  %v376 = vunpack.c.l.b16 %v241
  %v377 = vunpack.c.l.b16 %v242
  %v378 = vunpack.c.l.b16 %v243
  %v379 = vunpack.c.l.b16 %v244
  %v380 = vunpack.c.l.b16 %v245
  %v381 = vunpack.c.l.b16 %v246
  %v382 = vunpack.c.l.b16 %v247
  %v383 = vunpack.c.l.b16 %v248
  %v384 = vunpack.c.l.b16 %v249
  %v385 = vunpack.c.l.b16 %v250
  %v386 = vunpack.c.l.b16 %v251
  %v387 = vunpack.c.l.b16 %v252
  %v388 = vunpack.c.l.b16 %v253
  %v389 = vunpack.c.l.b16 %v254
  %v390 = vunpack.c.l.b16 %v255
  %v391 = vunpack.c.l.b16 %v256
  %v392 = vunpack.c.l.b16 %v257
  %v393 = vunpack.c.l.b16 %v258
  %v394 = vunpack.c.l.b16 %v259
  %v395 = vunpack.c.l.b16 %v260
  %v396 = vunpack.c.l.b16 %v261
  %v397 = vunpack.c.l.b16 %v262
  %v398 = vunpack.c.l.b16 %v263
  %v399 = vunpack.c.l.b16 %v264
  %v400 = vunpack.c.l.b16 %v265
  %v401 = vunpack.c.l.b16 %v266
  %v402 = vunpack.c.l.b16 %v267
  %v403 = vunpack.c.l.b16 %v268
  %v404 = vunpack.c.l.b16 %v269
  %v405 = vunpack.c.l.b16 %v270
  %v406 = vunpack.c.l.b16 %v271
  %v407 = vpack.c.b16 %v344, %v343
  %v408 = vpack.c.b16 %v346, %v345
  %v409 = vpack.c.b16 %v348, %v347
  %v410 = vpack.c.b16 %v350, %v349
  %v411 = vpack.c.b16 %v352, %v351
  %v412 = vpack.c.b16 %v354, %v353
  %v413 = vpack.c.b16 %v356, %v355
  %v414 = vpack.c.b16 %v358, %v357
  %v415 = vpack.c.b16 %v360, %v359
  %v416 = vpack.c.b16 %v362, %v361
  %v417 = vpack.c.b16 %v364, %v363
  %v418 = vpack.c.b16 %v366, %v365
  %v419 = vpack.c.b16 %v368, %v367
  %v420 = vpack.c.b16 %v370, %v369
  %v421 = vpack.c.b16 %v372, %v371
  %v422 = vpack.c.b16 %v374, %v373
  %v423 = vpack.c.b16 %v376, %v375
  %v424 = vpack.c.b16 %v378, %v377
  %v425 = vpack.c.b16 %v380, %v379
  %v426 = vpack.c.b16 %v382, %v381
  %v427 = vpack.c.b16 %v384, %v383
  %v428 = vpack.c.b16 %v386, %v385
  %v429 = vpack.c.b16 %v388, %v387
  %v430 = vpack.c.b16 %v390, %v389
  %v431 = vpack.c.b16 %v392, %v391
  %v432 = vpack.c.b16 %v394, %v393
  %v433 = vpack.c.b16 %v396, %v395
  %v434 = vpack.c.b16 %v398, %v397
  %v435 = vpack.c.b16 %v400, %v399
  %v436 = vpack.c.b16 %v402, %v401
  %v437 = vpack.c.b16 %v404, %v403
  %v438 = vpack.c.b16 %v406, %v405
  %471 = vmatprep.subr.bf16.mxu0 0
  %472 = vmatpush1.bf16.msra.mxu0 %v407
  %473 = vmatprep.subr.bf16.mxu0 0
  %474 = vmatpush1.bf16.msra.mxu0 %v408
  %475 = vmatprep.subr.bf16.mxu0 0
  %476 = vmatpush1.bf16.msra.mxu0 %v409
  %477 = vmatprep.subr.bf16.mxu0 0
  %478 = vmatpush1.bf16.msra.mxu0 %v410
  %479 = vmatprep.subr.bf16.mxu0 0
  %480 = vmatpush1.bf16.msra.mxu0 %v411
  %481 = vmatprep.subr.bf16.mxu0 0
  %482 = vmatpush1.bf16.msra.mxu0 %v412
  %483 = vmatprep.subr.bf16.mxu0 0
  %484 = vmatpush1.bf16.msra.mxu0 %v413
  %485 = vmatprep.subr.bf16.mxu0 0
  %486 = vmatpush1.bf16.msra.mxu0 %v414
  %487 = vmatprep.subr.bf16.mxu0 0
  %488 = vmatpush1.bf16.msra.mxu0 %v415
  %489 = vmatprep.subr.bf16.mxu0 0
  %490 = vmatpush1.bf16.msra.mxu0 %v416
  %491 = vmatprep.subr.bf16.mxu0 0
  %492 = vmatpush1.bf16.msra.mxu0 %v417
  %493 = vmatprep.subr.bf16.mxu0 0
  %494 = vmatpush1.bf16.msra.mxu0 %v418
  %495 = vmatprep.subr.bf16.mxu0 0
  %496 = vmatpush1.bf16.msra.mxu0 %v419
  %497 = vmatprep.subr.bf16.mxu0 0
  %498 = vmatpush1.bf16.msra.mxu0 %v420
  %499 = vmatprep.subr.bf16.mxu0 0
  %500 = vmatpush1.bf16.msra.mxu0 %v421
  %501 = vmatprep.subr.bf16.mxu0 0
  %502 = vmatpush1.bf16.msra.mxu0 %v422
  %503 = vmatprep.mubr.bf16.mxu0 %v205
  %504 = vmatmul.mubr.bf16.gmra.mrb[0].mxu0 %v204
  %v505 = vpop.f32.mrb[0].mxu0
  %v506 = vadd.f32 %v277, %v505
  %v507 = vpop.f32.mrb[0].mxu0
  %v508 = vpop.f32.mrb[0].mxu0
  %v509 = vadd.f32 %v277, %v508
  %v510 = vpop.f32.mrb[0].mxu0
  %511 = vdwg.mxu0
  %512 = vmatprep.subr.bf16.mxu0 0
  %513 = vmatpush1.bf16.msra.mxu0 %v423
  %514 = vmatprep.subr.bf16.mxu0 0
  %515 = vmatpush1.bf16.msra.mxu0 %v424
  %516 = vmatprep.subr.bf16.mxu0 0
  %517 = vmatpush1.bf16.msra.mxu0 %v425
  %518 = vmatprep.subr.bf16.mxu0 0
  %519 = vmatpush1.bf16.msra.mxu0 %v426
  %520 = vmatprep.subr.bf16.mxu0 0
  %521 = vmatpush1.bf16.msra.mxu0 %v427
  %522 = vmatprep.subr.bf16.mxu0 0
  %523 = vmatpush1.bf16.msra.mxu0 %v428
  %524 = vmatprep.subr.bf16.mxu0 0
  %525 = vmatpush1.bf16.msra.mxu0 %v429
  %526 = vmatprep.subr.bf16.mxu0 0
  %527 = vmatpush1.bf16.msra.mxu0 %v430
  %528 = vmatprep.subr.bf16.mxu0 0
  %529 = vmatpush1.bf16.msra.mxu0 %v431
  %530 = vmatprep.subr.bf16.mxu0 0
  %531 = vmatpush1.bf16.msra.mxu0 %v432
  %532 = vmatprep.subr.bf16.mxu0 0
  %533 = vmatpush1.bf16.msra.mxu0 %v433
  %534 = vmatprep.subr.bf16.mxu0 0
  %535 = vmatpush1.bf16.msra.mxu0 %v434
  %536 = vmatprep.subr.bf16.mxu0 0
  %537 = vmatpush1.bf16.msra.mxu0 %v435
  %538 = vmatprep.subr.bf16.mxu0 0
  %539 = vmatpush1.bf16.msra.mxu0 %v436
  %540 = vmatprep.subr.bf16.mxu0 0
  %541 = vmatpush1.bf16.msra.mxu0 %v437
  %542 = vmatprep.subr.bf16.mxu0 0
  %543 = vmatpush1.bf16.msra.mxu0 %v438
  %544 = vmatprep.mubr.bf16.mxu0 %v207
  %545 = vmatmul.mubr.bf16.gmra.mrb[0].mxu0 %v206
  %v546 = vpop.f32.mrb[0].mxu0
  %v547 = vadd.f32 %v506, %v546
  %v548 = vpop.f32.mrb[0].mxu0
  %v549 = vpop.f32.mrb[0].mxu0
  %v550 = vadd.f32 %v509, %v549
  %v551 = vpop.f32.mrb[0].mxu0
  %552 = vdwg.mxu0
  %v553 = vmax.f32 %v547, 0.0
  %v554 = vmax.f32 %v550, 0.0
  %v555 = vpack.c.bf16 %v554, %v553
  %v556 = vld [vmem:[%s5] sm:$0xf]
  %v557 = vld [vmem:[%s5 + $0x4] sm:$0xf]
  %v558 = vld [vmem:[%s5 + $0x8] sm:$0xf]
  %v559 = vld [vmem:[%s5 + $0xc] sm:$0xf]
  %v560 = vld [vmem:[%s5 + $0x10] sm:$0xf]
  %v561 = vld [vmem:[%s5 + $0x14] sm:$0xf]
  %v562 = vld [vmem:[%s5 + $0x18] sm:$0xf]
  %v563 = vld [vmem:[%s5 + $0x1c] sm:$0xf]
  %v564 = vld [vmem:[%s5 + $0x20] sm:$0xf]
  %v565 = vld [vmem:[%s5 + $0x24] sm:$0xf]
  %v566 = vld [vmem:[%s5 + $0x28] sm:$0xf]
  %v567 = vld [vmem:[%s5 + $0x2c] sm:$0xf]
  %v568 = vld [vmem:[%s5 + $0x30] sm:$0xf]
  %v569 = vld [vmem:[%s5 + $0x34] sm:$0xf]
  %v570 = vld [vmem:[%s5 + $0x38] sm:$0xf]
  %v571 = vld [vmem:[%s5 + $0x3c] sm:$0xf]
  %v572 = vld [vmem:[%s6] sm:$0x1]
  %v574 = vlaneseq
  %v575 = vshrl.u32 %v574, 7
  %v576 = vsub.s32 0, %v575
  %v577 = vrot.slane %v572, %v576
  %v595 = vunpack.c.l.b16 %v556
  %v596 = vunpack.c.l.b16 %v557
  %v597 = vunpack.c.l.b16 %v558
  %v598 = vunpack.c.l.b16 %v559
  %v599 = vunpack.c.l.b16 %v560
  %v600 = vunpack.c.l.b16 %v561
  %v601 = vunpack.c.l.b16 %v562
  %v602 = vunpack.c.l.b16 %v563
  %v603 = vunpack.c.l.b16 %v564
  %v604 = vunpack.c.l.b16 %v565
  %v605 = vunpack.c.l.b16 %v566
  %v606 = vunpack.c.l.b16 %v567
  %v607 = vunpack.c.l.b16 %v568
  %v608 = vunpack.c.l.b16 %v569
  %v609 = vunpack.c.l.b16 %v570
  %v610 = vunpack.c.l.b16 %v571
  %v611 = vpack.c.b16 %v596, %v595
  %v612 = vpack.c.b16 %v598, %v597
  %v613 = vpack.c.b16 %v600, %v599
  %v614 = vpack.c.b16 %v602, %v601
  %v615 = vpack.c.b16 %v604, %v603
  %v616 = vpack.c.b16 %v606, %v605
  %v617 = vpack.c.b16 %v608, %v607
  %v618 = vpack.c.b16 %v610, %v609
  %627 = vmatprep.subr.bf16.mxu0 0
  %628 = vmatpush1.bf16.msra.mxu0 %v611
  %629 = vmatprep.subr.bf16.mxu0 0
  %630 = vmatpush1.bf16.msra.mxu0 %v612
  %631 = vmatprep.subr.bf16.mxu0 0
  %632 = vmatpush1.bf16.msra.mxu0 %v613
  %633 = vmatprep.subr.bf16.mxu0 0
  %634 = vmatpush1.bf16.msra.mxu0 %v614
  %635 = vmatprep.subr.bf16.mxu0 0
  %636 = vmatpush1.bf16.msra.mxu0 %v615
  %637 = vmatprep.subr.bf16.mxu0 0
  %638 = vmatpush1.bf16.msra.mxu0 %v616
  %639 = vmatprep.subr.bf16.mxu0 0
  %640 = vmatpush1.bf16.msra.mxu0 %v617
  %641 = vmatprep.subr.bf16.mxu0 0
  %642 = vmatpush1.bf16.msra.mxu0 %v618
  %643 = vmatprep.subr.bf16.mxu0 0
  %644 = vmatpush1.bf16.msra.mxu0 0
  %645 = vmatprep.subr.bf16.mxu0 0
  %646 = vmatpush1.bf16.msra.mxu0 0
  %647 = vmatprep.subr.bf16.mxu0 0
  %648 = vmatpush1.bf16.msra.mxu0 0
  %649 = vmatprep.subr.bf16.mxu0 0
  %650 = vmatpush1.bf16.msra.mxu0 0
  %651 = vmatprep.subr.bf16.mxu0 0
  %652 = vmatpush1.bf16.msra.mxu0 0
  %653 = vmatprep.subr.bf16.mxu0 0
  %654 = vmatpush1.bf16.msra.mxu0 0
  %655 = vmatprep.subr.bf16.mxu0 0
  %656 = vmatpush1.bf16.msra.mxu0 0
  %657 = vmatprep.subr.bf16.mxu0 0
  %658 = vmatpush1.bf16.msra.mxu0 0
  %659 = vmatprep.mubr.bf16.mxu0 0
  %660 = vmatmul.mubr.bf16.gmra.mrb[0].mxu0 %v555
  %v661 = vpop.f32.mrb[0].mxu0
  %v662 = vadd.f32 %v577, %v661
  %v663 = vpop.f32.mrb[0].mxu0
  %v664 = vpop.f32.mrb[0].mxu0
  %v665 = vadd.f32 %v577, %v664
  %v666 = vpop.f32.mrb[0].mxu0
  %667 = vdwg.mxu0
  %v668 = vmax.f32 %v662, 0.0
  %v669 = vmax.f32 %v665, 0.0
  %v670 = vpack.c.bf16 %v669, %v668
  %v671 = vld [vmem:[%s7] sm:$0xf]
  %v672 = vld [vmem:[%s7 + $0x4] sm:$0xf]
  %v673 = vld [vmem:[%s7 + $0x8] sm:$0xf]
  %v674 = vld [vmem:[%s7 + $0xc] sm:$0xf]
  %v675 = vld [vmem:[%s8] sm:$0x1]
  %v677 = vlaneseq
  %v678 = vshrl.u32 %v677, 7
  %v679 = vsub.s32 0, %v678
  %v680 = vrot.slane %v675, %v679
  %v686 = vunpack.c.l.b16 %v671
  %v687 = vunpack.c.l.b16 %v672
  %v688 = vunpack.c.l.b16 %v673
  %v689 = vunpack.c.l.b16 %v674
  %v690 = vpack.c.b16 %v687, %v686
  %v691 = vpack.c.b16 %v689, %v688
  %v695 = vsel %vm106, %v670, 0
  %697 = vmatprep.subr.bf16.mxu0 0
  %698 = vmatpush1.bf16.msra.mxu0 %v690
  %699 = vmatprep.subr.bf16.mxu0 0
  %700 = vmatpush1.bf16.msra.mxu0 %v691
  %701 = vmatprep.subr.bf16.mxu0 0
  %702 = vmatpush1.bf16.msra.mxu0 0
  %703 = vmatprep.subr.bf16.mxu0 0
  %704 = vmatpush1.bf16.msra.mxu0 0
  %705 = vmatprep.subr.bf16.mxu0 0
  %706 = vmatpush1.bf16.msra.mxu0 0
  %707 = vmatprep.subr.bf16.mxu0 0
  %708 = vmatpush1.bf16.msra.mxu0 0
  %709 = vmatprep.subr.bf16.mxu0 0
  %710 = vmatpush1.bf16.msra.mxu0 0
  %711 = vmatprep.subr.bf16.mxu0 0
  %712 = vmatpush1.bf16.msra.mxu0 0
  %713 = vmatprep.subr.bf16.mxu0 0
  %714 = vmatpush1.bf16.msra.mxu0 0
  %715 = vmatprep.subr.bf16.mxu0 0
  %716 = vmatpush1.bf16.msra.mxu0 0
  %717 = vmatprep.subr.bf16.mxu0 0
  %718 = vmatpush1.bf16.msra.mxu0 0
  %719 = vmatprep.subr.bf16.mxu0 0
  %720 = vmatpush1.bf16.msra.mxu0 0
  %721 = vmatprep.subr.bf16.mxu0 0
  %722 = vmatpush1.bf16.msra.mxu0 0
  %723 = vmatprep.subr.bf16.mxu0 0
  %724 = vmatpush1.bf16.msra.mxu0 0
  %725 = vmatprep.subr.bf16.mxu0 0
  %726 = vmatpush1.bf16.msra.mxu0 0
  %727 = vmatprep.subr.bf16.mxu0 0
  %728 = vmatpush1.bf16.msra.mxu0 0
  %729 = vmatprep.mubr.bf16.mxu0 0
  %730 = vmatmul.mubr.bf16.gmra.mrb[0].mxu0 %v695
  %v731 = vpop.f32.mrb[0].mxu0
  %v732 = vadd.f32 %v680, %v731
  %v733 = vpop.f32.mrb[0].mxu0
  %v734 = vpop.f32.mrb[0].mxu0
  %v735 = vadd.f32 %v680, %v734
  %v736 = vpop.f32.mrb[0].mxu0
  %737 = vdwg.mxu0
  %v738 = vand.u32 2147483647, %v732
  %v739 = vand.u32 2147483647, %v735
  %v740 = vsub.f32 0.0, %v738
  %v741 = vsub.f32 0.0, %v739
  %v742 = vmul.f32 %v740, 1.442695
  %v743 = vpow.pop %v742
  %v744 = vmul.f32 %v741, 1.442695
  %v745 = vpow.pop %v744
  %v746 = vadd.f32 %v743, 1.0
  %v747 = vlog2.pop %v746
  %v748 = vmul.f32 %v747, 0.6931472
  %v749 = vmul.f32 -0.5, %v743
  %v750 = vadd.f32 %v749, 1.0
  %v751 = vmul.f32 %v750, %v743
  %v752 = vand.u32 2147483647, %v743
  %vm753 = vcmp.lt.f32.partialorder %v752, 0.0004427343
  %v754 = vsel %vm753, %v751, %v748
  %v755 = vadd.f32 %v745, 1.0
  %v756 = vlog2.pop %v755
  %v757 = vmul.f32 %v756, 0.6931472
  %v758 = vmul.f32 -0.5, %v745
  %v759 = vadd.f32 %v758, 1.0
  %v760 = vmul.f32 %v759, %v745
  %v761 = vand.u32 2147483647, %v745
  %vm762 = vcmp.lt.f32.partialorder %v761, 0.0004427343
  %v763 = vsel %vm762, %v760, %v757
  %v764 = vmax.f32 %v732, 0.0
  %v765 = vmax.f32 %v735, 0.0
  %v766 = vadd.f32 %v754, %v764
  %v767 = vadd.f32 %v763, %v765
  %768 = vst [vmem:[%s9] sm:$0xff] %v766
  %769 = vst [vmem:[%s9 + $0x8] sm:$0xff] %v767
  // Predicated region
  $region38: #{estimate_rho_do.1} parent=0 // pred_check
    _
  $region39: #{estimate_rho_do.1} parent=0 // pred_check_branch
    %771 = sbr.rel (0) target = $region41
  $region40: #{estimate_rho_do.1} parent=0 // pred_region
    _
  $region41: #{estimate_rho_do.1} parent=0 // pred_fallthru
    _
  // Predicated region
  $region42: #{estimate_rho_do.1} parent=0 // pred_check
    _
  $region43: #{estimate_rho_do.1} parent=0 // pred_check_branch
    %773 = sbr.rel (0) target = $region45
  $region44: #{estimate_rho_do.1} parent=0 // pred_region
    _
  $region45: #{estimate_rho_do.1} parent=0 // pred_fallthru
    _

</llo_original>
